<compile_context>
chip_gen: v6e
topology: v6e:2x2x1
jax: 0.10.0
libtpu: 0.0.40
codegen_flags: <defaults>
</compile_context>

<pallas_src>
import functools

import jax
import jax.numpy as jnp
from jax.experimental import pallas as pl
from jax.experimental.pallas import tpu as pltpu


# --------------------------------------------------------------------------
# Kernel: row-wise RMSNorm against a precomputed (1, H) f32 merged weight.
# --------------------------------------------------------------------------
def _dam_rmsnorm_kernel(x_ref, w_ref, o_ref, *, eps):
    # RMSNorm in float32 (torch: cast -> pow(2).mean(-1) -> rsqrt)
    x = x_ref[...].astype(jnp.float32)
    var = jnp.mean(x * x, axis=-1, keepdims=True)
    y = x * jax.lax.rsqrt(var + eps)
    # torch parity: weight(f32) * hidden_states.to(input_dtype); wrapper's
    # output dtype equals the input dtype.
    o_ref[...] = (w_ref[...] * y.astype(x_ref.dtype)).astype(o_ref.dtype)


# --------------------------------------------------------------------------
# Tiling helpers
# --------------------------------------------------------------------------
def _vmem_capacity_bytes():
    """Physical VMEM per TensorCore; default to 128 MiB (v5e/v6e) if the
    query fails (e.g. AOT compile on CPU)."""
    cap = 128 * 1024 * 1024
    try:
        info = pltpu.get_tpu_info()
        c = getattr(info, "vmem_capacity_bytes", None)
        if c:
            cap = int(c)
    except Exception:
        pass
    return cap


def _sublane_packing(dtype):
    # 8 rows for 32-bit, 16 for bf16, 32 for 8-bit dtypes.
    return 8 * max(1, 4 // jnp.dtype(dtype).itemsize)


def _choose_block_tokens(T, H, in_dtype, target_tile_bytes):
    """Largest sublane-aligned token tile hitting the input-tile byte target,
    while keeping enough grid steps for balanced 2-TC (v7x) sharding."""
    packing = _sublane_packing(in_dtype)
    in_sz = jnp.dtype(in_dtype).itemsize
    per_token = max(H * in_sz, 1)
    cand = max(target_tile_bytes // per_token, packing)
    # v7x megacore balance: keep >= ~8 grid steps once T is large enough.
    min_blocks = 8
    if T // min_blocks >= packing:
        cand = min(cand, (T // min_blocks) // packing * packing)
    # Never exceed the (sublane-rounded-up) token count.
    cand = min(cand, pl.cdiv(T, packing) * packing)
    cand = max((cand // packing) * packing, packing)
    return int(cand)


def _vmem_limit_bytes(block_tokens, H, in_dtype, out_dtype, cap):
    """Scoped-VMEM limit: estimated footprint + headroom, capped by the chip."""
    in_sz = jnp.dtype(in_dtype).itemsize
    out_sz = jnp.dtype(out_dtype).itemsize
    tile = block_tokens * H
    est = tile * (2 * in_sz + 2 * out_sz + 4)   # 2x-buffered I/O + one f32 temp
    est += 2 * H * 4                            # resident (1, H) f32 weight
    est += 8 * 1024 * 1024                      # compiler scratch headroom
    hard_cap = min((cap * 3) // 4, 96 * 1024 * 1024)
    return int(min(max(est, 32 * 1024 * 1024), hard_cap))


# --------------------------------------------------------------------------
# Wrapper
# --------------------------------------------------------------------------
def dam_rmsnorm(hidden_states, mergers, weights, *, eps=1e-5,
                model_index=None, block_tokens=None):
    """hidden_states: [..., H]; mergers/weights: [num_models, H]."""
    orig_shape = hidden_states.shape
    H = orig_shape[-1]
    x = hidden_states.reshape(-1, H)        # metadata-only reshape
    T = x.shape[0]
    out_dtype = hidden_states.dtype

    # Merged DAM weight, hoisted out of the kernel (tiny [M, H] op, done once;
    # safe under megacore sharding, unlike an in-kernel pl.when(i==0) init).
    if model_index is not None:
        merged_w = weights[model_index].astype(jnp.float32).reshape(1, H)
    else:
        merged_w = jnp.sum(
            jnp.tanh(mergers.astype(jnp.float32)) * weights.astype(jnp.float32),
            axis=0, keepdims=True)

    cap = _vmem_capacity_bytes()
    # ~8 MiB input tile on 128 MiB-VMEM parts (v5e/v6e), ~4 MiB on 64 MiB (v7x).
    target_tile = (8 << 20) if cap >= 100 * 1024 * 1024 else (4 << 20)
    if block_tokens is None:
        block_tokens = _choose_block_tokens(T, H, x.dtype, target_tile)
    vmem_limit = _vmem_limit_bytes(block_tokens, H, x.dtype, out_dtype, cap)

    kernel = functools.partial(_dam_rmsnorm_kernel, eps=eps)

    # Ragged T handled by a partial last block (row-wise op: OOB rows are
    # unspecified garbage but independent, and their writes are dropped).
    out = pl.pallas_call(
        kernel,
        out_shape=jax.ShapeDtypeStruct((T, H), out_dtype),
        grid_spec=pltpu.PrefetchScalarGridSpec(
            num_scalar_prefetch=0,
            grid=(pl.cdiv(T, block_tokens),),
            in_specs=[
                pl.BlockSpec((block_tokens, H), lambda i: (i, 0)),
                pl.BlockSpec((1, H), lambda i: (0, 0)),   # weight stays resident
            ],
            out_specs=pl.BlockSpec((block_tokens, H), lambda i: (i, 0)),
        ),
        compiler_params=pltpu.CompilerParams(
            dimension_semantics=("parallel",),   # lets v7x shard across 2 TCs
            vmem_limit_bytes=vmem_limit,
        ),
    )(x, merged_w)

    return out.reshape(orig_shape)


# --------------------------------------------------------------------------
# Pure-JAX reference (mirrors the torch forward)
# --------------------------------------------------------------------------
def dam_rmsnorm_reference(hidden_states, mergers, weights, eps=1e-5,
                          model_index=None):
    if model_index is not None:
        w = weights[model_index].astype(jnp.float32)
    else:
        w = jnp.sum(jnp.tanh(mergers.astype(jnp.float32))
                    * weights.astype(jnp.float32), axis=0)
    x = hidden_states.astype(jnp.float32)
    var = jnp.mean(x * x, axis=-1, keepdims=True)
    y = x * jax.lax.rsqrt(var + eps)
    return (w * y.astype(hidden_states.dtype)).astype(hidden_states.dtype)


if __name__ == "__main__":
    # Small shapes consistent with the module: batch=2, seq=8, hidden=128.
    batch, seq, hidden = 2, 8, 128
    num_models = 3
    eps = 1e-5

    key = jax.random.PRNGKey(0)
    x = jax.random.normal(key, (batch, seq, hidden), dtype=jnp.float32)

    # Deterministic parameter init, matching DAMRMSNorm.__init__:
    #   mergers_i = ones(H) * (1 / num_models)   (init_merger_values default)
    #   weights_i = ones(H)
    mergers = jnp.full((num_models, hidden), 1.0 / num_models, dtype=jnp.float32)
    weights = jnp.ones((num_models, hidden), dtype=jnp.float32)

    # --- default path (model_index=None, tanh merge), [B, S, H] input ----
    out = jax.block_until_ready(dam_rmsnorm(x, mergers, weights, eps=eps))
    ref = dam_rmsnorm_reference(x, mergers, weights, eps=eps)
    assert out.shape == x.shape
    assert jnp.allclose(out, ref, atol=1e-5, rtol=1e-5), "mismatch (merge path)"

    # --- ragged token count + bf16 input (exercises partial last block) --
    xb = jax.random.normal(jax.random.PRNGKey(1), (14, hidden), dtype=jnp.bfloat16)
    out_b = jax.block_until_ready(dam_rmsnorm(xb, mergers, weights, eps=eps))
    ref_b = dam_rmsnorm_reference(xb, mergers, weights, eps=eps)
    assert out_b.shape == xb.shape
    assert jnp.allclose(out_b.astype(jnp.float32), ref_b.astype(jnp.float32),
                        atol=2e-2, rtol=2e-2), "mismatch (bf16 ragged path)"

    # --- model_index path (plain single-model RMSNorm) -------------------
    out_m = jax.block_until_ready(
        dam_rmsnorm(x, mergers, weights, eps=eps, model_index=1))
    ref_m = dam_rmsnorm_reference(x, mergers, weights, eps=eps, model_index=1)
    assert jnp.allclose(out_m, ref_m, atol=1e-5, rtol=1e-5), "mismatch (indexed)"

    # TODO(synk): regularization helpers (compute_mergers_similarity/overlap,
    # L1/L2) are training-time losses, not part of forward; not translated.

    print("KERNEL_OK")
</pallas_src>

<mosaic_0001>
module attributes {stable_mosaic.version = 11 : i64} {
  func.func @_dam_rmsnorm_kernel(%arg0: i32, %arg1: memref<16x128xf32, #tpu.memory_space<vmem>>, %arg2: memref<1x128xf32, #tpu.memory_space<vmem>>, %arg3: memref<16x128xf32, #tpu.memory_space<vmem>>) attributes {dimension_semantics = [#tpu.dimension_semantics<parallel>], iteration_bounds = array<i64: 1>, scalar_prefetch = 0 : i64, scratch_operands = 0 : i64, tpu.core_type = #tpu.core_type<tc>, window_params = [{transform_indices = @transform_0, window_bounds = array<i64: 16, 128>}, {pipeline_mode = #tpu.pipeline_mode<synchronous>, transform_indices = @transform_1, window_bounds = array<i64: 1, 128>}, {transform_indices = @transform_2, window_bounds = array<i64: 16, 128>}]} {
    %c0 = arith.constant 0 : index
    %c0_0 = arith.constant 0 : index
    %0 = vector.load %arg1[%c0, %c0_0] : memref<16x128xf32, #tpu.memory_space<vmem>>, vector<16x128xf32>
    %1 = arith.mulf %0, %0 : vector<16x128xf32>
    %cst = arith.constant dense<0.000000e+00> : vector<16xf32>
    %2 = vector.multi_reduction <add>, %1, %cst [1] : vector<16x128xf32> to vector<16xf32>
    %3 = vector.shape_cast %2 : vector<16xf32> to vector<16x1xf32>
    %cst_1 = arith.constant 1.280000e+02 : f32
    %4 = vector.broadcast %cst_1 : f32 to vector<16x1xf32>
    %5 = arith.divf %3, %4 : vector<16x1xf32>
    %cst_2 = arith.constant 9.99999974E-6 : f32
    %6 = vector.broadcast %cst_2 : f32 to vector<16x1xf32>
    %7 = arith.addf %5, %6 : vector<16x1xf32>
    %8 = math.rsqrt %7 : vector<16x1xf32>
    %9 = vector.broadcast %8 : vector<16x1xf32> to vector<16x128xf32>
    %10 = arith.mulf %0, %9 : vector<16x128xf32>
    %c0_3 = arith.constant 0 : index
    %c0_4 = arith.constant 0 : index
    %11 = vector.load %arg2[%c0_3, %c0_4] : memref<1x128xf32, #tpu.memory_space<vmem>>, vector<1x128xf32>
    %12 = vector.broadcast %11 : vector<1x128xf32> to vector<16x128xf32>
    %13 = arith.mulf %12, %10 : vector<16x128xf32>
    %c0_5 = arith.constant 0 : index
    %c0_6 = arith.constant 0 : index
    %14 = vector.load %arg3[%c0_5, %c0_6] : memref<16x128xf32, #tpu.memory_space<vmem>>, vector<16x128xf32>
    tpu.vector_store %arg3[%c0_5, %c0_6], %13 {strides = array<i32>} : memref<16x128xf32, #tpu.memory_space<vmem>>, vector<16x128xf32>,
    return
  }
  func.func @transform_0(%arg0: i32) -> (i32, i32) {
    %c0_i32 = arith.constant 0 : i32
    %c0_i32_0 = arith.constant 0 : i32
    return %arg0, %c0_i32 : i32, i32
  }
  func.func @transform_1(%arg0: i32) -> (i32, i32) {
    %c0_i32 = arith.constant 0 : i32
    %c0_i32_0 = arith.constant 0 : i32
    %c0_i32_1 = arith.constant 0 : i32
    return %c0_i32, %c0_i32_0 : i32, i32
  }
  func.func @transform_2(%arg0: i32) -> (i32, i32) {
    %c0_i32 = arith.constant 0 : i32
    %c0_i32_0 = arith.constant 0 : i32
    return %arg0, %c0_i32 : i32, i32
  }
}

</mosaic_0001>

<llo_original>
// kernel: tpu_custom_call.1
$region0: #{tpu_custom_call.1}
  #allocation0 [shape = 'u32[]', space=smem, size = 0x4, offset = 0x4, fixed_abs, tag = 'smem constant byte address 0x4 - core index']
  #allocation1 [shape = 'u32[144,128]{1,0:T(1,128)}', space=vmem, size = 0x12000, scoped, tag = 'internal scratch']
  %s0 = inlined_call_operand.hbm [shape: f32[16,128], index: 0, kind: input, shape index: {}]
  %s1 = inlined_call_operand.vmem [shape: f32[1,128], index: 1, kind: input, shape index: {}]
  %s2 = inlined_call_operand.hbm [shape: f32[16,128], index: 2, kind: output, shape index: {}]
  %s3 = sld [smem:[#allocation0]]
  $region22: #{tpu_custom_call.1} parent=0
    _
  %s5 = ssub.s32 1, %s3
  %s6 = scalar_select 0, %s5, %s3
  $region1: #{tpu_custom_call.1} parent=0
    #allocation2 [shape = 'u8[8192]{0}', space=vmem, size = 0x2000, scoped, tag = 'input window, operand 0, single buffered']
    #allocation3 [shape = 's32[1]{0}', space=sflag, size = 0x4, scoped, tag = 'scoped memory for tpu_custom_call.1']
    #allocation4 [shape = 's32[1]{0}', space=sflag, size = 0x4, scoped, tag = 'scoped memory for tpu_custom_call.1']
    #allocation5 [shape = 'u8[8192]{0}', space=vmem, size = 0x2000, scoped, tag = 'output window, operand 0, single buffered']
    %7 = vsyncpa [#allocation3], 0
    %8 = vsyncpa [#allocation4], 0
    // Predicated region
    $region2: #{tpu_custom_call.1} parent=1 // pred_check
      _
    $region3: #{tpu_custom_call.1} parent=1 // pred_check_branch
      %10 = sbr.rel (0) target = $region5
    $region4: #{tpu_custom_call.1} parent=1 // pred_region
      %s12 = ssub.s32 256, 256
      %13 = vsyncadd [#allocation3], %s12
      %s14 = sshll.u32 [#allocation2], 4
      %s15 = int_to_ptr.vmem [resolvable:$true] %s14
      %20 = dma.hbm_to_vmem [thread:$0]  %s0, 256, %s15, [#allocation3], 128, 128, 8
    $region5: #{tpu_custom_call.1} parent=1 // pred_fallthru
      _
    // Predicated region
    $region6: #{tpu_custom_call.1} parent=1 // pred_check
      _
    $region7: #{tpu_custom_call.1} parent=1 // pred_check_branch
      %22 = sbr.rel (0) target = $region9
    $region8: #{tpu_custom_call.1} parent=1 // pred_region
      _
    $region9: #{tpu_custom_call.1} parent=1 // pred_fallthru
      _
    // Predicated region
    $region10: #{tpu_custom_call.1} parent=1 // pred_check
      _
    $region11: #{tpu_custom_call.1} parent=1 // pred_check_branch
      %24 = sbr.rel (0) target = $region13
    $region12: #{tpu_custom_call.1} parent=1 // pred_region
      %25 = dma.done [#allocation3], 256
    $region13: #{tpu_custom_call.1} parent=1 // pred_fallthru
      _
    %v26 = vld [vmem:[#allocation2] sm:$0xff]
    %v27 = vld [vmem:[#allocation2 + $0x8] sm:$0xff]
    %v28 = vmul.f32 %v26, %v26
    %v29 = vmul.f32 %v27, %v27
    %30 = vadd.xlane.f32.xlu0 %v28
    %v31 = vpop.xlane.xlu0 %30
    %32 = vadd.xlane.f32.xlu0 %v29
    %v33 = vpop.xlane.xlu0 %32
    %v34 = vrcp.pop 128.0
    %v35 = vmul.f32 %v31, %v34
    %v36 = vmul.f32 %v33, %v34
    %v37 = vadd.f32 %v35, 1e-05
    %v38 = vadd.f32 %v36, 1e-05
    %v39 = vrsqrt.pop %v37
    %v40 = vrsqrt.pop %v38
    %v41 = vmul.f32 %v26, %v39
    %v42 = vmul.f32 %v27, %v40
    %v43 = vld [vmem:[%s1] sm:$0x1]
    %v45 = vlaneseq
    %v46 = vshrl.u32 %v45, 7
    %v47 = vsub.s32 0, %v46
    %v48 = vrot.slane %v43, %v47
    %v50 = vmul.f32 %v48, %v41
    %v51 = vmul.f32 %v48, %v42
    %52 = vst [vmem:[#allocation5] sm:$0xff] %v50
    %53 = vst [vmem:[#allocation5 + $0x8] sm:$0xff] %v51
    // Predicated region
    $region14: #{tpu_custom_call.1} parent=1 // pred_check
      _
    $region15: #{tpu_custom_call.1} parent=1 // pred_check_branch
      %55 = sbr.rel (0) target = $region17
    $region16: #{tpu_custom_call.1} parent=1 // pred_region
      %s57 = ssub.s32 256, 256
      %58 = vsyncadd [#allocation4], %s57
      %s59 = sshll.u32 [#allocation5], 4
      %s60 = int_to_ptr.vmem [resolvable:$true] %s59
      %65 = dma.vmem_to_hbm [thread:$0]  %s60, 256, %s2, [#allocation4], 128, 128, 8
    $region17: #{tpu_custom_call.1} parent=1 // pred_fallthru
      _
    // Predicated region
    $region18: #{tpu_custom_call.1} parent=1 // pred_check
      _
    $region19: #{tpu_custom_call.1} parent=1 // pred_check_branch
      %67 = sbr.rel (0) target = $region21
    $region20: #{tpu_custom_call.1} parent=1 // pred_region
      %68 = dma.done [#allocation4], 256
    $region21: #{tpu_custom_call.1} parent=1 // pred_fallthru
      _
    %69 = vsyncpa [#allocation3], 1
    %70 = vsyncpa [#allocation4], 1

</llo_original>
